<compile_context>
chip_gen: v5e
topology: v5e:2x2
jax: 0.10.0
libtpu: 0.0.40
codegen_flags: <defaults>
</compile_context>

<pallas_src>
import jax
import jax.numpy as jnp
from jax.experimental import pallas as pl
from jax.experimental.pallas import tpu as pltpu


# ---------------------------------------------------------------------------
# Kernels
# ---------------------------------------------------------------------------

def _se_fused_kernel(x_ref, w1t_ref, w2t_ref, o_ref):
    """Single-pass SE. x_ref/o_ref: (TB, C, HW); w1t: (C, Cr); w2t: (Cr, C)."""
    # Squeeze: global average pool over the lane (spatial) axis, f32 accumulate.
    y = jnp.mean(x_ref[...], axis=-1, dtype=jnp.float32)              # (TB, C)

    # Excitation: fc1 -> ReLU -> fc2 -> sigmoid (tiny; kernel is HBM-bound).
    w1t = w1t_ref[...].astype(jnp.float32)
    w2t = w2t_ref[...].astype(jnp.float32)
    h = jnp.dot(y, w1t, preferred_element_type=jnp.float32)           # (TB, Cr)
    h = jnp.maximum(h, 0.0)
    g = jnp.dot(h, w2t, preferred_element_type=jnp.float32)           # (TB, C)
    g = jax.nn.sigmoid(g)

    # Scale: per-channel f32 gate broadcasts over the lane (spatial) axis;
    # only the product is cast down to the output dtype.
    o_ref[...] = (x_ref[...] * g[:, :, None]).astype(o_ref.dtype)


def _se_pool_kernel(x_ref, sum_ref):
    """Spatially tiled pool. x_ref: (1, C, T_hw); sum_ref: (1, C, 1) f32."""
    @pl.when(pl.program_id(1) == 0)
    def _():
        sum_ref[...] = jnp.zeros_like(sum_ref)
    sum_ref[...] += jnp.sum(x_ref[...], axis=-1, keepdims=True,
                            dtype=jnp.float32)


def _se_scale_kernel(x_ref, g_ref, o_ref):
    """Spatially tiled scale. x_ref/o_ref: (1, C, T_hw); g_ref: (1, C, 1) f32."""
    o_ref[...] = (x_ref[...] * g_ref[...]).astype(o_ref.dtype)


# ---------------------------------------------------------------------------
# Sizing helpers
# ---------------------------------------------------------------------------

def _vmem_capacity_bytes():
    """Per-core VMEM capacity; conservative v7x default if the query fails."""
    try:
        info = pltpu.get_tpu_info()
        cap = getattr(info, "vmem_capacity_bytes", None)
        if cap:
            return int(cap)
    except Exception:
        pass
    return 64 << 20


def _pick_batch_tile(B, slab_bytes, w_bytes, budget):
    """TB for the fused path; None if even TB=1 doesn't fit the VMEM budget."""
    usable = budget - 2 * w_bytes - (2 << 20)          # weights + headroom
    tb_vmem = int(usable // (4 * slab_bytes))          # dbl-buffered in + out
    if tb_vmem < 1:
        return None
    tb_target = max(int((4 << 20) // max(slab_bytes, 1)), 1)   # ~4 MiB blocks
    tb_max = max(min(tb_vmem, tb_target, B), 1)
    if B >= 2:                                          # >= 2 grid steps (megacore)
        tb_max = min(tb_max, max(B // 2, 1))
    for t in range(tb_max, 0, -1):                      # largest divisor of B
        if B % t == 0:
            return t
    return 1


def _pick_spatial_tile(HW, C, itemsize, budget):
    """Multiple-of-128 divisor of HW for the split path; None if not tileable."""
    if HW % 128 != 0 or HW < 256:
        return None
    max_tile_bytes = min(budget // 8, 4 << 20)
    best = None
    t = 128
    while t <= HW // 2:
        if HW % t == 0 and C * t * itemsize <= max_tile_bytes:
            best = t
        t += 128
    return best


# ---------------------------------------------------------------------------
# Wrapper
# ---------------------------------------------------------------------------

def se_block(x, w1, w2, *, force_split=False):
    """SEBlock forward.

    x:  (B, C, H, W)
    w1: (C//r, C)   -- first Linear (PyTorch layout), bias-free
    w2: (C, C//r)   -- second Linear (PyTorch layout), bias-free
    """
    B, C, H, W = x.shape
    HW = H * W
    Cr = w1.shape[0]

    itemsize = jnp.dtype(x.dtype).itemsize
    w_itemsize = jnp.dtype(w1.dtype).itemsize
    slab_bytes = C * HW * itemsize
    w_bytes = (w1.size + w2.size) * w_itemsize

    budget = int(_vmem_capacity_bytes() * 0.8)

    # Free metadata reshape only -- NCHW stays NCHW (no HBM relayout passes).
    x_l = x.reshape(B, C, HW)

    tb = _pick_batch_tile(B, slab_bytes, w_bytes, budget)
    t_hw = _pick_spatial_tile(HW, C, itemsize, budget)
    use_split = (force_split or tb is None) and (t_hw is not None)
    if tb is None and t_hw is None:
        tb = 1                                  # best effort: clamp to budget

    if not use_split:
        # ---------------- fused single-pass path ----------------
        n_b = B // tb
        w1t = jnp.transpose(w1)                 # (C, Cr) -- tiny
        w2t = jnp.transpose(w2)                 # (Cr, C)

        vmem_needed = 4 * tb * slab_bytes + 2 * w_bytes + (2 << 20)
        vmem_limit = int(min(max(vmem_needed, 16 << 20), budget))

        cost = pl.CostEstimate(
            flops=int(B * (4 * C * Cr + 2 * C * HW)),
            transcendentals=int(B * C),
            bytes_accessed=int(2 * B * slab_bytes + 2 * w_bytes),
        )

        out = pl.pallas_call(
            _se_fused_kernel,
            out_shape=jax.ShapeDtypeStruct((B, C, HW), x.dtype),
            grid_spec=pltpu.PrefetchScalarGridSpec(
                num_scalar_prefetch=0,
                grid=(n_b,),
                in_specs=[
                    pl.BlockSpec((tb, C, HW), lambda b: (b, 0, 0)),
                    pl.BlockSpec(w1t.shape, lambda b: (0, 0)),
                    pl.BlockSpec(w2t.shape, lambda b: (0, 0)),
                ],
                out_specs=pl.BlockSpec((tb, C, HW), lambda b: (b, 0, 0)),
            ),
            compiler_params=pltpu.CompilerParams(
                dimension_semantics=("parallel",),
                vmem_limit_bytes=vmem_limit,
            ),
            cost_estimate=cost,
        )(x_l, w1t, w2t)
        return out.reshape(B, C, H, W)

    # ---------------- spatially tiled split path ----------------
    n_s = HW // t_hw

    pool_vmem = int(min(max(2 * C * t_hw * itemsize + 8 * C + (2 << 20),
                            16 << 20), budget))
    sums = pl.pallas_call(
        _se_pool_kernel,
        out_shape=jax.ShapeDtypeStruct((B, C, 1), jnp.float32),
        grid_spec=pltpu.PrefetchScalarGridSpec(
            num_scalar_prefetch=0,
            grid=(B, n_s),
            in_specs=[pl.BlockSpec((1, C, t_hw), lambda b, s: (b, 0, s))],
            out_specs=pl.BlockSpec((1, C, 1), lambda b, s: (b, 0, 0)),
        ),
        compiler_params=pltpu.CompilerParams(
            dimension_semantics=("parallel", "arbitrary"),
            vmem_limit_bytes=pool_vmem,
        ),
        cost_estimate=pl.CostEstimate(
            flops=int(B * C * HW),
            transcendentals=0,
            bytes_accessed=int(B * slab_bytes + 4 * B * C),
        ),
    )(x_l)

    # Tiny FC + sigmoid in plain JAX (B*C elements; negligible vs the slab).
    y = sums[:, :, 0] * (1.0 / float(HW))                           # (B, C) f32
    h = jnp.maximum(jnp.dot(y, jnp.transpose(w1).astype(jnp.float32),
                            preferred_element_type=jnp.float32), 0.0)
    g = jax.nn.sigmoid(jnp.dot(h, jnp.transpose(w2).astype(jnp.float32),
                               preferred_element_type=jnp.float32))  # (B, C)
    g3 = g[:, :, None]                                               # (B, C, 1) f32

    scale_vmem = int(min(max(4 * C * t_hw * itemsize + 8 * C + (2 << 20),
                             16 << 20), budget))
    out = pl.pallas_call(
        _se_scale_kernel,
        out_shape=jax.ShapeDtypeStruct((B, C, HW), x.dtype),
        grid_spec=pltpu.PrefetchScalarGridSpec(
            num_scalar_prefetch=0,
            grid=(B, n_s),
            in_specs=[
                pl.BlockSpec((1, C, t_hw), lambda b, s: (b, 0, s)),
                pl.BlockSpec((1, C, 1), lambda b, s: (b, 0, 0)),
            ],
            out_specs=pl.BlockSpec((1, C, t_hw), lambda b, s: (b, 0, s)),
        ),
        compiler_params=pltpu.CompilerParams(
            dimension_semantics=("parallel", "parallel"),
            vmem_limit_bytes=scale_vmem,
        ),
        cost_estimate=pl.CostEstimate(
            flops=int(B * C * HW),
            transcendentals=0,
            bytes_accessed=int(2 * B * slab_bytes),
        ),
    )(x_l, g3)
    return out.reshape(B, C, H, W)


# ---------------------------------------------------------------------------
# Reference + self-test
# ---------------------------------------------------------------------------

def se_block_ref(x, w1, w2):
    """Pure-JAX reference matching the PyTorch forward (2d mode)."""
    y = jnp.mean(x, axis=(2, 3))                                     # avg pool + flatten
    y = jnp.maximum(jnp.dot(y, w1.T, precision=jax.lax.Precision.HIGHEST), 0.0)
    y = jax.nn.sigmoid(jnp.dot(y, w2.T, precision=jax.lax.Precision.HIGHEST))
    return x * y[:, :, None, None]


def _run_case(key, B, C, H, W, reduction, force_split=False):
    Cr = max(C // reduction, 1)
    kx, k1, k2 = jax.random.split(key, 3)
    x = jax.random.normal(kx, (B, C, H, W), dtype=jnp.float32)
    w1 = jax.random.normal(k1, (Cr, C), dtype=jnp.float32) * 0.5
    w2 = jax.random.normal(k2, (C, Cr), dtype=jnp.float32) * 0.5

    out = jax.block_until_ready(se_block(x, w1, w2, force_split=force_split))
    ref = se_block_ref(x, w1, w2)
    assert out.shape == (B, C, H, W)
    assert jnp.allclose(out, ref, atol=1e-3, rtol=1e-3), \
        f"mismatch vs reference for shape {(B, C, H, W)} (split={force_split})"


if __name__ == "__main__":
    key = jax.random.PRNGKey(0)
    k_a, k_b, k_c = jax.random.split(key, 3)

    # Fused path, HW lane-dense (HW = 256), small channel count.
    _run_case(k_a, B=2, C=16, H=16, W=16, reduction=4)

    # Fused path, larger channel count, small spatial (HW = 64, full-dim block).
    _run_case(k_b, B=2, C=128, H=8, W=8, reduction=4)

    # Tiled split path (pool + JAX FC + scale), exercised explicitly.
    _run_case(k_c, B=2, C=16, H=16, W=16, reduction=4, force_split=True)

    print("KERNEL_OK")
</pallas_src>

<mosaic_0001>
module attributes {stable_mosaic.version = 11 : i64} {
  func.func @_se_fused_kernel(%arg0: i32, %arg1: memref<1x16x256xf32, #tpu.memory_space<vmem>>, %arg2: memref<16x4xf32, #tpu.memory_space<vmem>>, %arg3: memref<4x16xf32, #tpu.memory_space<vmem>>, %arg4: memref<1x16x256xf32, #tpu.memory_space<vmem>>) attributes {dimension_semantics = [#tpu.dimension_semantics<parallel>], iteration_bounds = array<i64: 2>, scalar_prefetch = 0 : i64, scratch_operands = 0 : i64, tpu.core_type = #tpu.core_type<tc>, window_params = [{transform_indices = @transform_0, window_bounds = array<i64: 1, 16, 256>}, {pipeline_mode = #tpu.pipeline_mode<synchronous>, transform_indices = @transform_1, window_bounds = array<i64: 16, 4>}, {pipeline_mode = #tpu.pipeline_mode<synchronous>, transform_indices = @transform_2, window_bounds = array<i64: 4, 16>}, {transform_indices = @transform_3, window_bounds = array<i64: 1, 16, 256>}]} {
    %c0 = arith.constant 0 : index
    %c0_0 = arith.constant 0 : index
    %c0_1 = arith.constant 0 : index
    %0 = vector.load %arg1[%c0, %c0_0, %c0_1] : memref<1x16x256xf32, #tpu.memory_space<vmem>>, vector<1x16x256xf32>
    %cst = arith.constant dense<0.000000e+00> : vector<1x16xf32>
    %1 = vector.multi_reduction <add>, %0, %cst [2] : vector<1x16x256xf32> to vector<1x16xf32>
    %cst_2 = arith.constant 2.560000e+02 : f32
    %2 = vector.broadcast %cst_2 : f32 to vector<1x16xf32>
    %3 = arith.divf %1, %2 : vector<1x16xf32>
    %c0_3 = arith.constant 0 : index
    %c0_4 = arith.constant 0 : index
    %4 = vector.load %arg2[%c0_3, %c0_4] : memref<16x4xf32, #tpu.memory_space<vmem>>, vector<16x4xf32>
    %c0_5 = arith.constant 0 : index
    %c0_6 = arith.constant 0 : index
    %5 = vector.load %arg3[%c0_5, %c0_6] : memref<4x16xf32, #tpu.memory_space<vmem>>, vector<4x16xf32>
    %cst_7 = arith.constant dense<0.000000e+00> : vector<1x4xf32>
    %6 = tpu.matmul %3, %4, %cst_7 {dimension_numbers = #tpu.dot_dimension_numbers<[1], [0], [0], [1], [0, 0, 1, 1], [], []>} : vector<1x16xf32>, vector<16x4xf32>, vector<1x4xf32> -> vector<1x4xf32>
    %cst_8 = arith.constant 0.000000e+00 : f32
    %7 = vector.broadcast %cst_8 : f32 to vector<1x4xf32>
    %8 = arith.maximumf %6, %7 : vector<1x4xf32>
    %cst_9 = arith.constant dense<0.000000e+00> : vector<1x16xf32>
    %9 = tpu.matmul %8, %5, %cst_9 {dimension_numbers = #tpu.dot_dimension_numbers<[1], [0], [0], [1], [0, 0, 1, 1], [], []>} : vector<1x4xf32>, vector<4x16xf32>, vector<1x16xf32> -> vector<1x16xf32>
    %10 = arith.negf %9 : vector<1x16xf32>
    %11 = math.exp %10 : vector<1x16xf32>
    %cst_10 = arith.constant 1.000000e+00 : f32
    %12 = vector.broadcast %cst_10 : f32 to vector<1x16xf32>
    %13 = arith.addf %12, %11 : vector<1x16xf32>
    %14 = arith.divf %12, %13 : vector<1x16xf32>
    %c0_11 = arith.constant 0 : index
    %c0_12 = arith.constant 0 : index
    %c0_13 = arith.constant 0 : index
    %15 = vector.load %arg1[%c0_11, %c0_12, %c0_13] : memref<1x16x256xf32, #tpu.memory_space<vmem>>, vector<1x16x256xf32>
    %16 = vector.shape_cast %14 : vector<1x16xf32> to vector<1x16x1xf32>
    %17 = vector.broadcast %16 : vector<1x16x1xf32> to vector<1x16x256xf32>
    %18 = arith.mulf %15, %17 : vector<1x16x256xf32>
    %c0_14 = arith.constant 0 : index
    %c0_15 = arith.constant 0 : index
    %c0_16 = arith.constant 0 : index
    %19 = vector.load %arg4[%c0_14, %c0_15, %c0_16] : memref<1x16x256xf32, #tpu.memory_space<vmem>>, vector<1x16x256xf32>
    tpu.vector_store %arg4[%c0_14, %c0_15, %c0_16], %18 {strides = array<i32>} : memref<1x16x256xf32, #tpu.memory_space<vmem>>, vector<1x16x256xf32>,
    return
  }
  func.func @transform_0(%arg0: i32) -> (i32, i32, i32) {
    %c0_i32 = arith.constant 0 : i32
    %c0_i32_0 = arith.constant 0 : i32
    %c0_i32_1 = arith.constant 0 : i32
    return %arg0, %c0_i32, %c0_i32_0 : i32, i32, i32
  }
  func.func @transform_1(%arg0: i32) -> (i32, i32) {
    %c0_i32 = arith.constant 0 : i32
    %c0_i32_0 = arith.constant 0 : i32
    %c0_i32_1 = arith.constant 0 : i32
    return %c0_i32, %c0_i32_0 : i32, i32
  }
  func.func @transform_2(%arg0: i32) -> (i32, i32) {
    %c0_i32 = arith.constant 0 : i32
    %c0_i32_0 = arith.constant 0 : i32
    %c0_i32_1 = arith.constant 0 : i32
    return %c0_i32, %c0_i32_0 : i32, i32
  }
  func.func @transform_3(%arg0: i32) -> (i32, i32, i32) {
    %c0_i32 = arith.constant 0 : i32
    %c0_i32_0 = arith.constant 0 : i32
    %c0_i32_1 = arith.constant 0 : i32
    return %arg0, %c0_i32, %c0_i32_0 : i32, i32, i32
  }
}

</mosaic_0001>

<llo_original>
// kernel: tpu_custom_call.1
$region0: #{tpu_custom_call.1}
  #allocation0 [shape = 'u32[]', space=smem, size = 0x4, offset = 0x4, fixed_abs, tag = 'smem constant byte address 0x4 - core index']
  #allocation1 [shape = 'u32[72,128]{1,0:T(1,128)}', space=vmem, size = 0x9000, scoped, tag = 'internal scratch']
  %s0 = inlined_call_operand.hbm [shape: f32[2,16,256], index: 0, kind: input, shape index: {}]
  %s1 = inlined_call_operand.vmem [shape: f32[16,4], index: 1, kind: input, shape index: {}]
  %s2 = inlined_call_operand.vmem [shape: f32[4,16], index: 2, kind: input, shape index: {}]
  %s3 = inlined_call_operand.hbm [shape: f32[2,16,256], index: 3, kind: output, shape index: {}]
  %s4 = sld [smem:[#allocation0]]
  $region49: #{tpu_custom_call.1} parent=0
    _
  %s6 = ssub.s32 1, %s4
  %s7 = scalar_select 0, %s6, %s4
  $region1: #{tpu_custom_call.1} parent=0
    #allocation2 [shape = 'u8[32768]{0}', space=vmem, size = 0x8000, scoped, tag = 'input window, operand 0']
    #allocation3 [shape = 's32[2]{0}', space=sflag, size = 0x8, scoped, tag = 'scoped memory for tpu_custom_call.1']
    #allocation4 [shape = 's32[2]{0}', space=sflag, size = 0x8, scoped, tag = 'scoped memory for tpu_custom_call.1']
    #allocation5 [shape = 'u8[32768]{0}', space=vmem, size = 0x8000, scoped, tag = 'output window, operand 0']
    %8 = vsyncpa [#allocation3], 0
    %s9 = scalar_lea.sflag [#allocation3], 1
    %10 = vsyncpa %s9, 0
    %11 = vsyncpa [#allocation4], 0
    %s12 = scalar_lea.sflag [#allocation4], 1
    %13 = vsyncpa %s12, 0
    loop: start=0, step=1, limit=4
    $region2: #{tpu_custom_call.1} parent=1 // loop_pre_header
      _
    $region3: #{tpu_custom_call.1} parent=1 // loop_header
      %s15 = sphi 0, %s19
      %p16 = scmp.ge.s32.totalorder %s15, 4
      %s25 = sphi 0, %s27
      %s28 = sphi 0, %s25
      %s29 = sphi 0, %s28
      %s45 = sphi 0, %s29
      %s49 = sphi 0, %s49
      %s51 = sphi 0, %s49
      %s52 = sphi 0, %s51
      %s66 = sphi 0, %s52
      %s70 = sphi 0, %s70
      %s72 = sphi 0, %s70
      %s73 = sphi 0, %s72
      %s87 = sphi 0, %s73
      %s93 = sphi 0, %s95
      %s96 = sphi 0, %s93
      %s97 = sphi 0, %s96
      %s113 = sphi 0, %s97
    $region4: #{tpu_custom_call.1} parent=1 // loop_header_branch
      %18 = sbr.rel (%p16) target = $region8
    $region5: #{tpu_custom_call.1} parent=1 // loop_body
      %s20 = ssub.s32 %s15, 1
      %s21 = ssub.s32 %s15, 2
      %s22 = sadd.s32 %s15, 1
      %s23 = ssub.s32 %s15, %s22
      %p24 = scmp.eq.s32.totalorder %s23, 0
      %s26 = sadd.s32 %s25, 1
      %s27 = scalar_select %p24, %s25, %s26
      %p30 = pneg %p24
      %p31 = scmp.eq.s32.totalorder %s15, 1
      %p32 = por %p30, %p31
      %p33 = scmp.ne.s32.totalorder %s25, %s28
      %p34 = scmp.eq.s32.totalorder %s15, 0
      %p35 = por %p33, %p34
      %p36 = scmp.ne.s32.totalorder %s25, %s28
      %p37 = scmp.eq.s32.totalorder %s20, 1
      %p38 = por %p36, %p37
      %p39 = scmp.ne.s32.totalorder %s28, %s29
      %p40 = scmp.eq.s32.totalorder %s20, 0
      %p41 = por %p39, %p40
      %p42 = scmp.ne.s32.totalorder %s28, %s29
      %p43 = scmp.eq.s32.totalorder %s21, 1
      %p44 = por %p42, %p43
      %p46 = scmp.ne.s32.totalorder %s29, %s45
      %p47 = scmp.eq.s32.totalorder %s21, 0
      %p48 = por %p46, %p47
      %s50 = sadd.s32 %s49, 1
      %p53 = scmp.eq.s32.totalorder %s15, 1
      %p54 = scmp.ne.s32.totalorder %s49, %s51
      %p55 = scmp.eq.s32.totalorder %s15, 0
      %p56 = por %p54, %p55
      %p57 = scmp.ne.s32.totalorder %s49, %s51
      %p58 = scmp.eq.s32.totalorder %s20, 1
      %p59 = por %p57, %p58
      %p60 = scmp.ne.s32.totalorder %s51, %s52
      %p61 = scmp.eq.s32.totalorder %s20, 0
      %p62 = por %p60, %p61
      %p63 = scmp.ne.s32.totalorder %s51, %s52
      %p64 = scmp.eq.s32.totalorder %s21, 1
      %p65 = por %p63, %p64
      %p67 = scmp.ne.s32.totalorder %s52, %s66
      %p68 = scmp.eq.s32.totalorder %s21, 0
      %p69 = por %p67, %p68
      %s71 = sadd.s32 %s70, 1
      %p74 = scmp.eq.s32.totalorder %s15, 1
      %p75 = scmp.ne.s32.totalorder %s70, %s72
      %p76 = scmp.eq.s32.totalorder %s15, 0
      %p77 = por %p75, %p76
      %p78 = scmp.ne.s32.totalorder %s70, %s72
      %p79 = scmp.eq.s32.totalorder %s20, 1
      %p80 = por %p78, %p79
      %p81 = scmp.ne.s32.totalorder %s72, %s73
      %p82 = scmp.eq.s32.totalorder %s20, 0
      %p83 = por %p81, %p82
      %p84 = scmp.ne.s32.totalorder %s72, %s73
      %p85 = scmp.eq.s32.totalorder %s21, 1
      %p86 = por %p84, %p85
      %p88 = scmp.ne.s32.totalorder %s73, %s87
      %p89 = scmp.eq.s32.totalorder %s21, 0
      %p90 = por %p88, %p89
      %s91 = ssub.s32 %s15, %s22
      %p92 = scmp.eq.s32.totalorder %s91, 0
      %s94 = sadd.s32 %s93, 1
      %s95 = scalar_select %p92, %s93, %s94
      %p98 = pneg %p92
      %p99 = scmp.eq.s32.totalorder %s15, 1
      %p100 = por %p98, %p99
      %p101 = scmp.ne.s32.totalorder %s93, %s96
      %p102 = scmp.eq.s32.totalorder %s15, 0
      %p103 = por %p101, %p102
      %p104 = scmp.ne.s32.totalorder %s93, %s96
      %p105 = scmp.eq.s32.totalorder %s20, 1
      %p106 = por %p104, %p105
      %p107 = scmp.ne.s32.totalorder %s96, %s97
      %p108 = scmp.eq.s32.totalorder %s20, 0
      %p109 = por %p107, %p108
      %p110 = scmp.ne.s32.totalorder %s96, %s97
      %p111 = scmp.eq.s32.totalorder %s21, 1
      %p112 = por %p110, %p111
      %p114 = scmp.ne.s32.totalorder %s97, %s113
      %p115 = scmp.eq.s32.totalorder %s21, 0
      %p116 = por %p114, %p115
      %p117 = scmp.le.s32.totalorder 1, %s15
      %p118 = scmp.lt.s32.totalorder %s15, 3
      %p119 = pnand %p117, %p118
      %p120 = pneg %p119
      // Predicated region
      $region9: #{tpu_custom_call.1} parent=5 // pred_check
        _
      $region10: #{tpu_custom_call.1} parent=5 // pred_check_branch
        %122 = sbr.rel (%p119) target = $region12
      $region11: #{tpu_custom_call.1} parent=5 // pred_region
        %s123 = ssub.s32 %s15, 1
        // Predicated region
        $region13: #{tpu_custom_call.1} parent=11 // pred_check
          %p124 = pneg %p62
        $region14: #{tpu_custom_call.1} parent=11 // pred_check_branch
          %126 = sbr.rel (%p124) target = $region16
        $region15: #{tpu_custom_call.1} parent=11 // pred_region
          _
        $region16: #{tpu_custom_call.1} parent=11 // pred_fallthru
          _
        // Predicated region
        $region17: #{tpu_custom_call.1} parent=11 // pred_check
          %p127 = pneg %p83
        $region18: #{tpu_custom_call.1} parent=11 // pred_check_branch
          %129 = sbr.rel (%p127) target = $region20
        $region19: #{tpu_custom_call.1} parent=11 // pred_region
          _
        $region20: #{tpu_custom_call.1} parent=11 // pred_fallthru
          _
      $region12: #{tpu_custom_call.1} parent=5 // pred_fallthru
        _
      %p130 = scmp.lt.s32.totalorder %s15, 2
      // Predicated region
      $region21: #{tpu_custom_call.1} parent=5 // pred_check
        %p131 = pneg %p130
      $region22: #{tpu_custom_call.1} parent=5 // pred_check_branch
        %133 = sbr.rel (%p131) target = $region24
      $region23: #{tpu_custom_call.1} parent=5 // pred_region
        // Predicated region
        $region25: #{tpu_custom_call.1} parent=23 // pred_check
          %p134 = pneg %p35
        $region26: #{tpu_custom_call.1} parent=23 // pred_check_branch
          %136 = sbr.rel (%p134) target = $region28
        $region27: #{tpu_custom_call.1} parent=23 // pred_region
          %s137 = sand.u32 %s25, 1
          %s138 = scalar_lea.sflag [#allocation3], %s137
          %s139 = sand.u32 %s25, 1
          %s140 = smul.addr %s139, 32
          %s141 = scalar_lea.vmem [#allocation2], %s140
          %143 = vsyncadd %s138, 0
          %s144 = smul.addr %s15, 4
          %s145 = smul.addr %s144, 8
          %s146 = scalar_lea.hbm %s0, %s145
          %s147 = sshll.u32 %s146, 4
          %s148 = int_to_ptr.hbm [resolvable:$true] %s147
          %s149 = sshll.u32 %s141, 4
          %s150 = int_to_ptr.vmem [resolvable:$true] %s149
          %155 = dma.hbm_to_vmem [thread:$0]  %s148, 512, %s150, %s138, 256, 256, 16
        $region28: #{tpu_custom_call.1} parent=23 // pred_fallthru
          _
      $region24: #{tpu_custom_call.1} parent=5 // pred_fallthru
        _
      %p156 = scmp.le.s32.totalorder 1, %s15
      %p157 = scmp.lt.s32.totalorder %s15, 3
      %p158 = pnand %p156, %p157
      %p159 = pneg %p158
      // Predicated region
      $region29: #{tpu_custom_call.1} parent=5 // pred_check
        _
      $region30: #{tpu_custom_call.1} parent=5 // pred_check_branch
        %161 = sbr.rel (%p158) target = $region32
      $region31: #{tpu_custom_call.1} parent=5 // pred_region
        %s162 = ssub.s32 %s15, 1
        %s163 = sand.u32 %s28, 1
        %s164 = scalar_lea.sflag [#allocation3], %s163
        %s165 = sand.u32 %s28, 1
        %s166 = smul.addr %s165, 32
        %s167 = scalar_lea.vmem [#allocation2], %s166
        // Predicated region
        $region33: #{tpu_custom_call.1} parent=31 // pred_check
          %p168 = pneg %p41
        $region34: #{tpu_custom_call.1} parent=31 // pred_check_branch
          %170 = sbr.rel (%p168) target = $region36
        $region35: #{tpu_custom_call.1} parent=31 // pred_region
          %172 = dma.done %s164, 512
        $region36: #{tpu_custom_call.1} parent=31 // pred_fallthru
          _
        %s173 = sand.u32 %s28, 1
        %s174 = scalar_lea.sflag [#allocation3], %s173
        %s175 = sand.u32 %s28, 1
        %s176 = smul.addr %s175, 32
        %s177 = scalar_lea.vmem [#allocation2], %s176
        %p178 = pneg %p41
        %p179 = pneg %p38
        %p180 = pneg %p62
        %p181 = pneg %p59
        %p182 = pneg %p83
        %p183 = pneg %p80
        %p184 = pneg %p109
        %p185 = pneg %p106
        %s186 = sand.u32 %s96, 1
        %s187 = scalar_lea.sflag [#allocation4], %s186
        %s188 = sand.u32 %s96, 1
        %s189 = smul.addr %s188, 32
        %s190 = scalar_lea.vmem [#allocation5], %s189
        %v191 = vld [vmem:[%s167] sm:$0xff]
        %v192 = vld [vmem:[%s167 + $0x8] sm:$0xff]
        %v193 = vld [vmem:[%s167 + $0x10] sm:$0xff]
        %v194 = vld [vmem:[%s167 + $0x18] sm:$0xff]
        %v195 = vadd.f32 %v191, %v192
        %196 = vadd.xlane.f32.xlu0 %v195
        %v197 = vpop.xlane.xlu0 %196
        %v198 = vadd.f32 %v193, %v194
        %199 = vadd.xlane.f32.xlu0 %v198
        %v200 = vpop.xlane.xlu0 %199
        %v201 = vrcp.pop 256.0
        %v202 = vmul.f32 256.0, %v201
        %v203 = vsub.f32 1.0, %v202
        %v204 = vmul.f32 %v201, %v203
        %v205 = vadd.f32 %v201, %v204
        %vm206 = vweird.f32 %v201
        %v207 = vsel %vm206, %v201, %v205
        %v208 = vmul.f32 %v197, %v207
        %v209 = vmul.f32 %v200, %v207
        %v210 = vld [vmem:[%s1] sm:$0xff]
        %v211 = vld [vmem:[%s1 + $0x8] sm:$0xff]
        %v212 = vld [vmem:[%s2] sm:$0xf]
        %v215 = vlaneseq
        %v216 = vand.u32 %v215, 127
        %v217 = vperm.slane %v208, %v216
        %v218 = vadd.s32 %v216, 4294967288
        %v219 = vperm.slane %v209, %v218
        %vm220 = vcmask 130112
        %v221 = vsel %vm220, %v219, %v217
        %vm222 = vcmask 130048
        %v223 = vsel %vm222, %v221, 0
        %225 = vmatpush.msra.mxu0 0.0
        %226 = vmatpush.msra.mxu0 0.0
        %227 = vmatpush.msra.mxu0 0.0
        %228 = vmatpush.msra.mxu0 0.0
        %229 = vmatpush.msra.mxu0 0.0
        %230 = vmatpush.msra.mxu0 0.0
        %231 = vmatpush.msra.mxu0 0.0
        %232 = vmatpush.msra.mxu0 0.0
        %233 = vmatpush.msra.mxu0 0.0
        %234 = vmatpush.msra.mxu0 0.0
        %235 = vmatpush.msra.mxu0 0.0
        %236 = vmatpush.msra.mxu0 0.0
        %237 = vmatpush.msra.mxu0 0.0
        %238 = vmatpush.msra.mxu0 0.0
        %239 = vmatpush.msra.mxu0 %v211
        %240 = vmatpush.msra.mxu0 %v210
        %241 = vmatmul.f32.gmra.mxu0 %v223
        %v242 = vpop.f32.mrf.mxu0
        %v243 = vadd.f32 0.0, %v242
        %244 = vdwg.mxu0
        %v245 = vmax.f32 %v243, 0.0
        %vm246 = vcmask 31744
        %v248 = vsel %vm246, %v245, 0
        %vm250 = vcmask 1043456
        %v252 = vsel %vm250, %v212, 0
        %254 = vmatpush.msra.mxu0 0.0
        %255 = vmatpush.msra.mxu0 0.0
        %256 = vmatpush.msra.mxu0 0.0
        %257 = vmatpush.msra.mxu0 0.0
        %258 = vmatpush.msra.mxu0 0.0
        %259 = vmatpush.msra.mxu0 0.0
        %260 = vmatpush.msra.mxu0 0.0
        %261 = vmatpush.msra.mxu0 0.0
        %262 = vmatpush.msra.mxu0 0.0
        %263 = vmatpush.msra.mxu0 0.0
        %264 = vmatpush.msra.mxu0 0.0
        %265 = vmatpush.msra.mxu0 0.0
        %266 = vmatpush.msra.mxu0 0.0
        %267 = vmatpush.msra.mxu0 0.0
        %268 = vmatpush.msra.mxu0 0.0
        %269 = vmatpush.msra.mxu0 %v252
        %270 = vmatmul.f32.gmra.mxu0 %v248
        %v271 = vpop.f32.mrf.mxu0
        %v272 = vadd.f32 0.0, %v271
        %273 = vdwg.mxu0
        %v274 = vxor.u32 %v272, 2147483648
        %v275 = vmul.f32 %v274, 1.442695
        %v276 = vpow.pop %v275
        %v277 = vadd.f32 %v276, 1.0
        %v278 = vrcp.pop %v277
        %v279 = vmul.f32 %v277, %v278
        %v280 = vsub.f32 1.0, %v279
        %v281 = vmul.f32 %v278, %v280
        %v282 = vadd.f32 %v278, %v281
        %vm283 = vweird.f32 %v277
        %vm284 = vweird.f32 %v278
        %vm285 = vmor %vm283, %vm284
        %v286 = vsel %vm285, %v278, %v282
        %v287 = vand.u32 2147483647, %v277
        %vm288 = vcmp.eq.f32.partialorder %v287, 8.507059e+37
        %v289 = vand.u32 %v277, 2147483648
        %v290 = vor.u32 1.1754944e-38, %v289
        %v291 = vsel %vm288, %v290, %v286
        %v292 = vmul.f32 1.0, %v291
        %v293 = vperm.slane %v292, 0
        %v294 = vlaneseq
        %v295 = vshrl.u32 %v294, 7
        %297 = vset.pattern.permute.xlu0 %v295
        %298 = vperm.xlu0 %297, %v293
        %v299 = vpop.permute.xlu0 %298
        %v300 = vlaneseq
        %v301 = vshrl.u32 %v300, 7
        %v302 = vadd.s32 %v301, 8
        %303 = vset.pattern.permute.xlu0 %v302
        %304 = vperm.xlu0 %303, %v293
        %v305 = vpop.permute.xlu0 %304
        %v306 = vmul.f32 %v191, %v299
        %v307 = vmul.f32 %v192, %v299
        %v308 = vmul.f32 %v193, %v305
        %v309 = vmul.f32 %v194, %v305
        %310 = vst [vmem:[%s190] sm:$0xff] %v306
        %311 = vst [vmem:[%s190 + $0x8] sm:$0xff] %v307
        %312 = vst [vmem:[%s190 + $0x10] sm:$0xff] %v308
        %313 = vst [vmem:[%s190 + $0x18] sm:$0xff] %v309
        %s314 = sand.u32 %s96, 1
        %s315 = scalar_lea.sflag [#allocation4], %s314
        %s316 = sand.u32 %s96, 1
        %s317 = smul.addr %s316, 32
        %s318 = scalar_lea.vmem [#allocation5], %s317
        // Predicated region
        $region37: #{tpu_custom_call.1} parent=31 // pred_check
          %p319 = pneg %p106
        $region38: #{tpu_custom_call.1} parent=31 // pred_check_branch
          %321 = sbr.rel (%p319) target = $region40
        $region39: #{tpu_custom_call.1} parent=31 // pred_region
          %323 = vsyncadd %s315, 0
          %s324 = smul.addr %s20, 4
          %s325 = smul.addr %s324, 8
          %s326 = scalar_lea.hbm %s3, %s325
          %s327 = sshll.u32 %s318, 4
          %s328 = int_to_ptr.vmem [resolvable:$true] %s327
          %s329 = sshll.u32 %s326, 4
          %s330 = int_to_ptr.hbm [resolvable:$true] %s329
          %335 = dma.vmem_to_hbm [thread:$0]  %s328, 512, %s330, %s315, 256, 256, 16
        $region40: #{tpu_custom_call.1} parent=31 // pred_fallthru
          _
      $region32: #{tpu_custom_call.1} parent=5 // pred_fallthru
        _
      %p336 = scmp.le.s32.totalorder 2, %s15
      // Predicated region
      $region41: #{tpu_custom_call.1} parent=5 // pred_check
        %p337 = pneg %p336
      $region42: #{tpu_custom_call.1} parent=5 // pred_check_branch
        %339 = sbr.rel (%p337) target = $region44
      $region43: #{tpu_custom_call.1} parent=5 // pred_region
        %s340 = ssub.s32 %s15, 2
        // Predicated region
        $region45: #{tpu_custom_call.1} parent=43 // pred_check
          %p341 = pneg %p112
        $region46: #{tpu_custom_call.1} parent=43 // pred_check_branch
          %343 = sbr.rel (%p341) target = $region48
        $region47: #{tpu_custom_call.1} parent=43 // pred_region
          %s344 = sand.u32 %s97, 1
          %s345 = scalar_lea.sflag [#allocation4], %s344
          %s346 = sand.u32 %s97, 1
          %s347 = smul.addr %s346, 32
          %s348 = scalar_lea.vmem [#allocation5], %s347
          %350 = dma.done %s345, 512
        $region48: #{tpu_custom_call.1} parent=43 // pred_fallthru
          _
      $region44: #{tpu_custom_call.1} parent=5 // pred_fallthru
        _
    $region6: #{tpu_custom_call.1} parent=1 // loop_footer
      %s19 = sadd.s32 1, %s15
    $region7: #{tpu_custom_call.1} parent=1 // loop_footer_branch
      %14 = sbr.rel target = $region3
    $region8: #{tpu_custom_call.1} parent=1 // loop_exit
      _
    %351 = vsyncpa [#allocation3], 1
    %s352 = scalar_lea.sflag [#allocation3], 1
    %353 = vsyncpa %s352, 1
    %354 = vsyncpa [#allocation4], 1
    %s355 = scalar_lea.sflag [#allocation4], 1
    %356 = vsyncpa %s355, 1

</llo_original>
